<compile_context>
chip_gen: v6e
topology: v6e:2x2x1
jax: 0.10.0
libtpu: 0.0.40
codegen_flags: <defaults>
</compile_context>

<pallas_src>
import functools

import numpy as np
import jax
import jax.numpy as jnp
from jax.experimental import pallas as pl
from jax.experimental.pallas import tpu as pltpu


def _dwt_kernel(x_ref, m_ref, o_ref, *, w, tw):
    # x_ref: (1, TR, 2W)  rows = (c, h2), lanes = [even input row | odd input row]
    # m_ref: (TW, TW)     column-pair selection matrix, cols = [pair-sum | pair-diff]*0.5
    # o_ref: (1, 4, TR, W2) subbands [LL, HL, LH, HH]
    half = tw // 2
    m = m_ref[...]
    for c in range(w // tw):            # static unroll over column chunks
        lo = c * tw
        e = x_ref[0, :, lo:lo + tw]             # even input rows, this column chunk
        o = x_ref[0, :, w + lo:w + lo + tw]     # odd  input rows, this column chunk
        rs = e + o                              # row-pair sum   (VPU)
        rd = o - e                              # row-pair diff  (VPU)
        # Column-pair combine + de-interleave on the MXU (idle otherwise).
        ys = jnp.dot(rs, m, precision=jax.lax.Precision.HIGHEST,
                     preferred_element_type=jnp.float32)   # [:half]=LL, [half:]=HL
        yd = jnp.dot(rd, m, precision=jax.lax.Precision.HIGHEST,
                     preferred_element_type=jnp.float32)   # [:half]=LH, [half:]=HH
        oo = c * half
        o_ref[0, 0, :, oo:oo + half] = ys[:, :half].astype(o_ref.dtype)   # LL
        o_ref[0, 1, :, oo:oo + half] = ys[:, half:].astype(o_ref.dtype)   # HL
        o_ref[0, 2, :, oo:oo + half] = yd[:, :half].astype(o_ref.dtype)   # LH
        o_ref[0, 3, :, oo:oo + half] = yd[:, half:].astype(o_ref.dtype)   # HH


def _selection_matrix_np(tw):
    """(TW, TW) matrix: y = x @ M gives [pair sums | pair diffs], scaled by 0.5."""
    half = tw // 2
    m = np.zeros((tw, tw), dtype=np.float32)
    j = np.arange(half)
    m[2 * j, j] = 0.5
    m[2 * j + 1, j] = 0.5
    m[2 * j, half + j] = -0.5
    m[2 * j + 1, half + j] = 0.5
    return m


def _pick_col_chunk(w):
    """Largest even divisor of W that is <= 256 (bounds MXU work, ~MXU tile sized)."""
    for cand in range(min(w, 256), 1, -1):
        if cand % 2 == 0 and w % cand == 0:
            return cand
    return 2


def _pick_row_chunk(n, r, w, itemsize):
    """Row chunk: ~<=4 MiB input block, dtype-aware sublane alignment, >=4 grid steps."""
    pack = 8 * max(1, 4 // itemsize)                      # 8 (f32) / 16 (bf16) / 32 (int8)
    max_rows = max(pack, (4 * 1024 * 1024) // (2 * w * itemsize))
    tr = min(r, 1024, max_rows)
    if tr < r:
        tr = max(pack, (tr // pack) * pack)               # aligned; cdiv grid masks the tail
    # v7x megacore: make sure both TensorCores get work when possible.
    while n * pl.cdiv(r, tr) < 4 and tr > pack:
        nxt = max(pack, ((tr // 2) // pack) * pack)
        if nxt >= tr:
            break
        tr = nxt
    return tr


def dwt_forward(x):
    """Haar DWT. x: (N, C, H, W), even H and W -> (N, 4C, H/2, W/2), order [LL|HL|LH|HH]."""
    N, C, H, W = x.shape
    assert H % 2 == 0 and W % 2 == 0, "even spatial dims required"
    H2, W2 = H // 2, W // 2
    R = C * H2
    itemsize = jnp.dtype(x.dtype).itemsize

    # Metadata-only reshape: row (c, h2) = [input row 2*h2 | input row 2*h2+1].
    xr = x.reshape(N, R, 2 * W)

    TW = _pick_col_chunk(W)
    TR = _pick_row_chunk(N, R, W, itemsize)
    sel = jnp.asarray(_selection_matrix_np(TW), dtype=x.dtype)

    grid = (N, pl.cdiv(R, TR))
    kernel = functools.partial(_dwt_kernel, w=W, tw=TW)

    out = pl.pallas_call(
        kernel,
        out_shape=jax.ShapeDtypeStruct((N, 4, R, W2), x.dtype),
        grid_spec=pltpu.PrefetchScalarGridSpec(
            num_scalar_prefetch=0,
            grid=grid,
            in_specs=[
                pl.BlockSpec((1, TR, 2 * W), lambda n, t: (n, t, 0)),
                pl.BlockSpec((TW, TW), lambda n, t: (0, 0)),   # constant, fetched once
            ],
            out_specs=pl.BlockSpec((1, 4, TR, W2), lambda n, t: (n, 0, t, 0)),
        ),
        compiler_params=pltpu.CompilerParams(
            dimension_semantics=("parallel", "parallel"),
            vmem_limit_bytes=32 * 1024 * 1024,
        ),
        cost_estimate=pl.CostEstimate(
            flops=int((2 * TW + 2) * x.size),
            transcendentals=0,
            bytes_accessed=int(2 * x.size * itemsize),
        ),
    )(xr, sel)

    # (N, 4, C*H2, W2) row-major == (N, 4C, H2, W2): metadata-only reshape, no HBM pass.
    return out.reshape(N, 4 * C, H2, W2)


def _dwt_reference(x):
    x01 = x[:, :, 0::2, :] / 2
    x02 = x[:, :, 1::2, :] / 2
    x1 = x01[:, :, :, 0::2]
    x2 = x02[:, :, :, 0::2]
    x3 = x01[:, :, :, 1::2]
    x4 = x02[:, :, :, 1::2]
    x_ll = x1 + x2 + x3 + x4
    x_hl = -x1 - x2 + x3 + x4
    x_lh = -x1 + x2 - x3 + x4
    x_hh = x1 - x2 - x3 + x4
    return jnp.concatenate((x_ll, x_hl, x_lh, x_hh), axis=1)


if __name__ == "__main__":
    key = jax.random.PRNGKey(0)
    x = jax.random.normal(key, (2, 4, 16, 16), dtype=jnp.float32)

    out = jax.block_until_ready(jax.jit(dwt_forward)(x))
    ref = _dwt_reference(x)

    assert out.shape == (2, 16, 8, 8), out.shape
    max_err = float(jnp.max(jnp.abs(out - ref)))
    assert jnp.allclose(out, ref, atol=1e-5, rtol=1e-5), max_err
    print("KERNEL_OK")
</pallas_src>

<mosaic_0001>
module attributes {stable_mosaic.version = 11 : i64} {
  func.func @_dwt_kernel(%arg0: i32, %arg1: i32, %arg2: memref<1x16x32xf32, #tpu.memory_space<vmem>>, %arg3: memref<16x16xf32, #tpu.memory_space<vmem>>, %arg4: memref<1x4x16x8xf32, #tpu.memory_space<vmem>>) attributes {dimension_semantics = [#tpu.dimension_semantics<parallel>, #tpu.dimension_semantics<parallel>], iteration_bounds = array<i64: 2, 2>, scalar_prefetch = 0 : i64, scratch_operands = 0 : i64, tpu.core_type = #tpu.core_type<tc>, window_params = [{transform_indices = @transform_0, window_bounds = array<i64: 1, 16, 32>}, {pipeline_mode = #tpu.pipeline_mode<synchronous>, transform_indices = @transform_1, window_bounds = array<i64: 16, 16>}, {transform_indices = @transform_2, window_bounds = array<i64: 1, 4, 16, 8>}]} {
    %c0 = arith.constant 0 : index
    %c0_0 = arith.constant 0 : index
    %0 = vector.load %arg3[%c0, %c0_0] : memref<16x16xf32, #tpu.memory_space<vmem>>, vector<16x16xf32>
    %c0_1 = arith.constant 0 : index
    %c0_2 = arith.constant 0 : index
    %c0_3 = arith.constant 0 : index
    %1 = vector.load %arg2[%c0_1, %c0_2, %c0_3] : memref<1x16x32xf32, #tpu.memory_space<vmem>>, vector<1x16x16xf32>
    %2 = vector.shape_cast %1 : vector<1x16x16xf32> to vector<16x16xf32>
    %c0_4 = arith.constant 0 : index
    %c0_5 = arith.constant 0 : index
    %c16 = arith.constant 16 : index
    %3 = vector.load %arg2[%c0_4, %c0_5, %c16] : memref<1x16x32xf32, #tpu.memory_space<vmem>>, vector<1x16x16xf32>
    %4 = vector.shape_cast %3 : vector<1x16x16xf32> to vector<16x16xf32>
    %5 = arith.addf %2, %4 : vector<16x16xf32>
    %6 = arith.subf %4, %2 : vector<16x16xf32>
    %cst = arith.constant dense<0.000000e+00> : vector<16x16xf32>
    %7 = tpu.matmul %5, %0, %cst {dimension_numbers = #tpu.dot_dimension_numbers<[1], [0], [0], [1], [0, 0, 1, 1], [], []>, precision = #tpu.contract_precision<fp32>} : vector<16x16xf32>, vector<16x16xf32>, vector<16x16xf32> -> vector<16x16xf32>
    %cst_6 = arith.constant dense<0.000000e+00> : vector<16x16xf32>
    %8 = tpu.matmul %6, %0, %cst_6 {dimension_numbers = #tpu.dot_dimension_numbers<[1], [0], [0], [1], [0, 0, 1, 1], [], []>, precision = #tpu.contract_precision<fp32>} : vector<16x16xf32>, vector<16x16xf32>, vector<16x16xf32> -> vector<16x16xf32>
    %9 = vector.extract_strided_slice %7 {offsets = [0, 0], sizes = [16, 8], strides = [1, 1]} : vector<16x16xf32> to vector<16x8xf32>
    %c0_7 = arith.constant 0 : index
    %c0_8 = arith.constant 0 : index
    %c0_9 = arith.constant 0 : index
    %c0_10 = arith.constant 0 : index
    %10 = vector.load %arg4[%c0_7, %c0_8, %c0_9, %c0_10] : memref<1x4x16x8xf32, #tpu.memory_space<vmem>>, vector<1x1x16x8xf32>
    %11 = vector.shape_cast %10 : vector<1x1x16x8xf32> to vector<16x8xf32>
    %12 = vector.shape_cast %9 : vector<16x8xf32> to vector<1x1x16x8xf32>
    tpu.vector_store %arg4[%c0_7, %c0_8, %c0_9, %c0_10], %12 {strides = array<i32>} : memref<1x4x16x8xf32, #tpu.memory_space<vmem>>, vector<1x1x16x8xf32>,
    %13 = vector.extract_strided_slice %7 {offsets = [0, 8], sizes = [16, 8], strides = [1, 1]} : vector<16x16xf32> to vector<16x8xf32>
    %c0_11 = arith.constant 0 : index
    %c1 = arith.constant 1 : index
    %c0_12 = arith.constant 0 : index
    %c0_13 = arith.constant 0 : index
    %14 = vector.load %arg4[%c0_11, %c1, %c0_12, %c0_13] : memref<1x4x16x8xf32, #tpu.memory_space<vmem>>, vector<1x1x16x8xf32>
    %15 = vector.shape_cast %14 : vector<1x1x16x8xf32> to vector<16x8xf32>
    %16 = vector.shape_cast %13 : vector<16x8xf32> to vector<1x1x16x8xf32>
    tpu.vector_store %arg4[%c0_11, %c1, %c0_12, %c0_13], %16 {strides = array<i32>} : memref<1x4x16x8xf32, #tpu.memory_space<vmem>>, vector<1x1x16x8xf32>,
    %17 = vector.extract_strided_slice %8 {offsets = [0, 0], sizes = [16, 8], strides = [1, 1]} : vector<16x16xf32> to vector<16x8xf32>
    %c0_14 = arith.constant 0 : index
    %c2 = arith.constant 2 : index
    %c0_15 = arith.constant 0 : index
    %c0_16 = arith.constant 0 : index
    %18 = vector.load %arg4[%c0_14, %c2, %c0_15, %c0_16] : memref<1x4x16x8xf32, #tpu.memory_space<vmem>>, vector<1x1x16x8xf32>
    %19 = vector.shape_cast %18 : vector<1x1x16x8xf32> to vector<16x8xf32>
    %20 = vector.shape_cast %17 : vector<16x8xf32> to vector<1x1x16x8xf32>
    tpu.vector_store %arg4[%c0_14, %c2, %c0_15, %c0_16], %20 {strides = array<i32>} : memref<1x4x16x8xf32, #tpu.memory_space<vmem>>, vector<1x1x16x8xf32>,
    %21 = vector.extract_strided_slice %8 {offsets = [0, 8], sizes = [16, 8], strides = [1, 1]} : vector<16x16xf32> to vector<16x8xf32>
    %c0_17 = arith.constant 0 : index
    %c3 = arith.constant 3 : index
    %c0_18 = arith.constant 0 : index
    %c0_19 = arith.constant 0 : index
    %22 = vector.load %arg4[%c0_17, %c3, %c0_18, %c0_19] : memref<1x4x16x8xf32, #tpu.memory_space<vmem>>, vector<1x1x16x8xf32>
    %23 = vector.shape_cast %22 : vector<1x1x16x8xf32> to vector<16x8xf32>
    %24 = vector.shape_cast %21 : vector<16x8xf32> to vector<1x1x16x8xf32>
    tpu.vector_store %arg4[%c0_17, %c3, %c0_18, %c0_19], %24 {strides = array<i32>} : memref<1x4x16x8xf32, #tpu.memory_space<vmem>>, vector<1x1x16x8xf32>,
    return
  }
  func.func @transform_0(%arg0: i32, %arg1: i32) -> (i32, i32, i32) {
    %c0_i32 = arith.constant 0 : i32
    %c0_i32_0 = arith.constant 0 : i32
    return %arg0, %arg1, %c0_i32 : i32, i32, i32
  }
  func.func @transform_1(%arg0: i32, %arg1: i32) -> (i32, i32) {
    %c0_i32 = arith.constant 0 : i32
    %c0_i32_0 = arith.constant 0 : i32
    %c0_i32_1 = arith.constant 0 : i32
    return %c0_i32, %c0_i32_0 : i32, i32
  }
  func.func @transform_2(%arg0: i32, %arg1: i32) -> (i32, i32, i32, i32) {
    %c0_i32 = arith.constant 0 : i32
    %c0_i32_0 = arith.constant 0 : i32
    %c0_i32_1 = arith.constant 0 : i32
    return %arg0, %c0_i32, %arg1, %c0_i32_0 : i32, i32, i32, i32
  }
}

</mosaic_0001>

<llo_original>
// kernel: dwt_forward.1
$region0: #{dwt_forward.1}
  #allocation0 [shape = 'u32[]', space=smem, size = 0x4, offset = 0x4, fixed_abs, tag = 'smem constant byte address 0x4 - core index']
  #allocation1 [shape = 'u32[144,128]{1,0:T(1,128)}', space=vmem, size = 0x12000, scoped, tag = 'internal scratch']
  %s0 = inlined_call_operand.vmem [shape: f32[2,32,32], index: 0, kind: input, shape index: {}]
  %s1 = inlined_call_operand.vmem [shape: f32[16,16], index: 1, kind: input, shape index: {}]
  %s2 = inlined_call_operand.vmem [shape: f32[2,4,32,8], index: 2, kind: output, shape index: {}]
  %s3 = sld [smem:[#allocation0]]
  $region75: #{dwt_forward.1} parent=0
    _
  %s5 = ssub.s32 1, %s3
  %s6 = scalar_select 0, %s5, %s3
  $region1: #{dwt_forward.1} parent=0
    #allocation2 [shape = 'u8[65536]{0}', space=vmem, size = 0x10000, scoped, tag = 'output window, operand 0']
    loop: start=0, step=1, limit=6
    $region2: #{dwt_forward.1} parent=1 // loop_pre_header
      _
    $region3: #{dwt_forward.1} parent=1 // loop_header
      %s8 = sphi 0, %s12
      %p9 = scmp.ge.s32.totalorder %s8, 6
      %s15 = sphi 0, %s27
      %s16 = sphi 0, %s23
      %s17 = sphi 0, %s15
      %s18 = sphi 0, %s16
      %s19 = sphi 0, %s17
      %s20 = sphi 0, %s18
      %s32 = sphi 0, %s34
      %s35 = sphi 0, %s32
      %s36 = sphi 0, %s35
      %s52 = sphi 0, %s36
      %s56 = sphi 0, %s56
      %s58 = sphi 0, %s56
      %s59 = sphi 0, %s58
      %s73 = sphi 0, %s59
      %s81 = sphi 0, %s83
      %s84 = sphi 0, %s81
      %s85 = sphi 0, %s84
      %s101 = sphi 0, %s85
    $region4: #{dwt_forward.1} parent=1 // loop_header_branch
      %11 = sbr.rel (%p9) target = $region8
    $region5: #{dwt_forward.1} parent=1 // loop_body
      %s13 = ssub.s32 %s8, 1
      %s14 = ssub.s32 %s8, 2
      %s21 = sadd.s32 1, %s16
      %p22 = scmp.ge.s32.totalorder %s21, 2
      %s23 = scalar_select %p22, 0, %s21
      %s24 = sadd.s32 1, %s15
      %s25 = scalar_select %p22, %s24, %s15
      %p26 = scmp.ge.s32.totalorder %s25, 2
      %s27 = scalar_select %p26, 0, %s25
      %s28 = ssub.s32 %s15, %s27
      %s29 = ssub.s32 %s16, %s23
      %s30 = sor.u32 %s28, %s29
      %p31 = scmp.eq.s32.totalorder %s30, 0
      %s33 = sadd.s32 %s32, 1
      %s34 = scalar_select %p31, %s32, %s33
      %p37 = pneg %p31
      %p38 = scmp.eq.s32.totalorder %s8, 3
      %p39 = por %p37, %p38
      %p40 = scmp.ne.s32.totalorder %s32, %s35
      %p41 = scmp.eq.s32.totalorder %s8, 0
      %p42 = por %p40, %p41
      %p43 = scmp.ne.s32.totalorder %s32, %s35
      %p44 = scmp.eq.s32.totalorder %s13, 3
      %p45 = por %p43, %p44
      %p46 = scmp.ne.s32.totalorder %s35, %s36
      %p47 = scmp.eq.s32.totalorder %s13, 0
      %p48 = por %p46, %p47
      %p49 = scmp.ne.s32.totalorder %s35, %s36
      %p50 = scmp.eq.s32.totalorder %s14, 3
      %p51 = por %p49, %p50
      %p53 = scmp.ne.s32.totalorder %s36, %s52
      %p54 = scmp.eq.s32.totalorder %s14, 0
      %p55 = por %p53, %p54
      %s57 = sadd.s32 %s56, 1
      %p60 = scmp.eq.s32.totalorder %s8, 3
      %p61 = scmp.ne.s32.totalorder %s56, %s58
      %p62 = scmp.eq.s32.totalorder %s8, 0
      %p63 = por %p61, %p62
      %p64 = scmp.ne.s32.totalorder %s56, %s58
      %p65 = scmp.eq.s32.totalorder %s13, 3
      %p66 = por %p64, %p65
      %p67 = scmp.ne.s32.totalorder %s58, %s59
      %p68 = scmp.eq.s32.totalorder %s13, 0
      %p69 = por %p67, %p68
      %p70 = scmp.ne.s32.totalorder %s58, %s59
      %p71 = scmp.eq.s32.totalorder %s14, 3
      %p72 = por %p70, %p71
      %p74 = scmp.ne.s32.totalorder %s59, %s73
      %p75 = scmp.eq.s32.totalorder %s14, 0
      %p76 = por %p74, %p75
      %s77 = ssub.s32 %s15, %s27
      %s78 = ssub.s32 %s16, %s23
      %s79 = sor.u32 %s77, %s78
      %p80 = scmp.eq.s32.totalorder %s79, 0
      %s82 = sadd.s32 %s81, 1
      %s83 = scalar_select %p80, %s81, %s82
      %p86 = pneg %p80
      %p87 = scmp.eq.s32.totalorder %s8, 3
      %p88 = por %p86, %p87
      %p89 = scmp.ne.s32.totalorder %s81, %s84
      %p90 = scmp.eq.s32.totalorder %s8, 0
      %p91 = por %p89, %p90
      %p92 = scmp.ne.s32.totalorder %s81, %s84
      %p93 = scmp.eq.s32.totalorder %s13, 3
      %p94 = por %p92, %p93
      %p95 = scmp.ne.s32.totalorder %s84, %s85
      %p96 = scmp.eq.s32.totalorder %s13, 0
      %p97 = por %p95, %p96
      %p98 = scmp.ne.s32.totalorder %s84, %s85
      %p99 = scmp.eq.s32.totalorder %s14, 3
      %p100 = por %p98, %p99
      %p102 = scmp.ne.s32.totalorder %s85, %s101
      %p103 = scmp.eq.s32.totalorder %s14, 0
      %p104 = por %p102, %p103
      %p105 = scmp.le.s32.totalorder 1, %s8
      %p106 = scmp.lt.s32.totalorder %s8, 5
      %p107 = pnand %p105, %p106
      %p108 = pneg %p107
      // Predicated region
      $region9: #{dwt_forward.1} parent=5 // pred_check
        _
      $region10: #{dwt_forward.1} parent=5 // pred_check_branch
        %110 = sbr.rel (%p107) target = $region12
      $region11: #{dwt_forward.1} parent=5 // pred_region
        %s111 = ssub.s32 %s8, 1
        // Predicated region
        $region13: #{dwt_forward.1} parent=11 // pred_check
          %p112 = pneg %p69
        $region14: #{dwt_forward.1} parent=11 // pred_check_branch
          %114 = sbr.rel (%p112) target = $region16
        $region15: #{dwt_forward.1} parent=11 // pred_region
          _
        $region16: #{dwt_forward.1} parent=11 // pred_fallthru
          _
      $region12: #{dwt_forward.1} parent=5 // pred_fallthru
        _
      %p115 = scmp.lt.s32.totalorder %s8, 4
      // Predicated region
      $region17: #{dwt_forward.1} parent=5 // pred_check
        %p116 = pneg %p115
      $region18: #{dwt_forward.1} parent=5 // pred_check_branch
        %118 = sbr.rel (%p116) target = $region20
      $region19: #{dwt_forward.1} parent=5 // pred_region
        // Predicated region
        $region21: #{dwt_forward.1} parent=19 // pred_check
          %p119 = pneg %p42
        $region22: #{dwt_forward.1} parent=19 // pred_check_branch
          %121 = sbr.rel (%p119) target = $region24
        $region23: #{dwt_forward.1} parent=19 // pred_region
          %s122 = smul.u32 2, %s16
          %p123 = scmp.lt.s32.totalorder %s15, 1
          %s124 = scalar_select %p123, %s15, 1
          %p125 = scmp.lt.s32.totalorder %s122, 3
          %s126 = scalar_select %p125, %s122, 3
          %s127 = smul.addr %s124, 4
          %s128 = sadd.s32 %s126, %s127
          %s129 = smul.addr %s128, 8
          %s130 = scalar_lea.vmem %s0, %s129
          %s131 = smul.u32 2, %s16
        $region24: #{dwt_forward.1} parent=19 // pred_fallthru
          _
      $region20: #{dwt_forward.1} parent=5 // pred_fallthru
        _
      %p132 = scmp.le.s32.totalorder 1, %s8
      %p133 = scmp.lt.s32.totalorder %s8, 5
      %p134 = pnand %p132, %p133
      %p135 = pneg %p134
      // Predicated region
      $region25: #{dwt_forward.1} parent=5 // pred_check
        _
      $region26: #{dwt_forward.1} parent=5 // pred_check_branch
        %137 = sbr.rel (%p134) target = $region28
      $region27: #{dwt_forward.1} parent=5 // pred_region
        %s138 = ssub.s32 %s8, 1
        %s139 = smul.u32 2, %s18
        %p140 = scmp.lt.s32.totalorder %s17, 1
        %s141 = scalar_select %p140, %s17, 1
        %p142 = scmp.lt.s32.totalorder %s139, 3
        %s143 = scalar_select %p142, %s139, 3
        %s144 = smul.addr %s141, 4
        %s145 = sadd.s32 %s143, %s144
        %s146 = smul.addr %s145, 8
        %s147 = scalar_lea.vmem %s0, %s146
        %p148 = pneg %p48
        %p149 = pneg %p45
        %p150 = pneg %p69
        %p151 = pneg %p66
        %p152 = pneg %p97
        %p153 = pneg %p94
        %s154 = sand.u32 %s84, 1
        %s155 = sand.u32 %s84, 1
        %s156 = smul.addr %s155, 64
        %s157 = scalar_lea.vmem [#allocation2], %s156
        %s158 = smul.u32 2, %s18
        %p159 = scmp.lt.s32.totalorder %s17, 1
        %s160 = scalar_select %p159, %s17, 1
        %p161 = scmp.lt.s32.totalorder %s158, 3
        %s162 = scalar_select %p161, %s158, 3
        %s163 = smul.addr %s160, 4
        %s164 = sadd.s32 %s162, %s163
        %s165 = smul.addr %s164, 8
        %s166 = scalar_lea.vmem %s0, %s165
        %s167 = smul.u32 2, %s18
        %s168 = smul.u32 2, %s18
        %v169 = vld [vmem:[%s1] sm:$0xff]
        %v170 = vld [vmem:[%s1 + $0x8] sm:$0xff]
        %v171 = vld [vmem:[%s166] sm:$0xff]
        %v172 = vld [vmem:[%s166 + $0x8] sm:$0xff]
        %175 = vrot.lane.b32.xlu0 %v171, 112
        %v176 = vpop.permute.xlu0 %175
        %177 = vrot.lane.b32.xlu0 %v172, 112
        %v178 = vpop.permute.xlu0 %177
        %v181 = vadd.f32 %v171, %v176
        %v182 = vadd.f32 %v172, %v178
        %183 = vrot.lane.b32.xlu0 %v171, 16
        %v184 = vpop.permute.xlu0 %183
        %185 = vrot.lane.b32.xlu0 %v172, 16
        %v186 = vpop.permute.xlu0 %185
        %v189 = vsub.f32 %v171, %v184
        %v190 = vsub.f32 %v172, %v186
        %vm191 = vcmask 130048
        %v193 = vsel %vm191, %v181, 0
        %v196 = vsel %vm191, %v182, 0
        %198 = vmatprep.subr.mxu0 0.0
        %199 = vmatpush1.msra.mxu0 0.0
        %200 = vmatprep.subr.mxu0 0.0
        %201 = vmatpush1.msra.mxu0 0.0
        %202 = vmatprep.subr.mxu0 0.0
        %203 = vmatpush1.msra.mxu0 0.0
        %204 = vmatprep.subr.mxu0 0.0
        %205 = vmatpush1.msra.mxu0 0.0
        %206 = vmatprep.subr.mxu0 0.0
        %207 = vmatpush1.msra.mxu0 0.0
        %208 = vmatprep.subr.mxu0 0.0
        %209 = vmatpush1.msra.mxu0 0.0
        %210 = vmatprep.subr.mxu0 0.0
        %211 = vmatpush1.msra.mxu0 0.0
        %212 = vmatprep.subr.mxu0 0.0
        %213 = vmatpush1.msra.mxu0 0.0
        %214 = vmatprep.subr.mxu0 0.0
        %215 = vmatpush1.msra.mxu0 0.0
        %216 = vmatprep.subr.mxu0 0.0
        %217 = vmatpush1.msra.mxu0 0.0
        %218 = vmatprep.subr.mxu0 0.0
        %219 = vmatpush1.msra.mxu0 0.0
        %220 = vmatprep.subr.mxu0 0.0
        %221 = vmatpush1.msra.mxu0 0.0
        %222 = vmatprep.subr.mxu0 0.0
        %223 = vmatpush1.msra.mxu0 0.0
        %224 = vmatprep.subr.mxu0 0.0
        %225 = vmatpush1.msra.mxu0 0.0
        %226 = vmatprep.subr.mxu0 0.0
        %v227 = vand.u32 %v170, 4294901760
        %228 = vmatpush1.msra.mxu0 %v227
        %229 = vmatprep.subr.mxu0 0.0
        %v230 = vand.u32 %v169, 4294901760
        %231 = vmatpush1.msra.mxu0 %v230
        %232 = vmatprep.subr.mxu0 0.0
        %233 = vmatpush2.msra.mxu0 0.0
        %234 = vmatprep.subr.mxu0 0.0
        %235 = vmatpush2.msra.mxu0 0.0
        %236 = vmatprep.subr.mxu0 0.0
        %237 = vmatpush2.msra.mxu0 0.0
        %238 = vmatprep.subr.mxu0 0.0
        %239 = vmatpush2.msra.mxu0 0.0
        %240 = vmatprep.subr.mxu0 0.0
        %241 = vmatpush2.msra.mxu0 0.0
        %242 = vmatprep.subr.mxu0 0.0
        %243 = vmatpush2.msra.mxu0 0.0
        %244 = vmatprep.subr.mxu0 0.0
        %245 = vmatpush2.msra.mxu0 0.0
        %246 = vmatprep.subr.mxu0 0.0
        %247 = vmatpush2.msra.mxu0 0.0
        %248 = vmatprep.subr.mxu0 0.0
        %249 = vmatpush2.msra.mxu0 0.0
        %250 = vmatprep.subr.mxu0 0.0
        %251 = vmatpush2.msra.mxu0 0.0
        %252 = vmatprep.subr.mxu0 0.0
        %253 = vmatpush2.msra.mxu0 0.0
        %254 = vmatprep.subr.mxu0 0.0
        %255 = vmatpush2.msra.mxu0 0.0
        %256 = vmatprep.subr.mxu0 0.0
        %257 = vmatpush2.msra.mxu0 0.0
        %258 = vmatprep.subr.mxu0 0.0
        %259 = vmatpush2.msra.mxu0 0.0
        %260 = vmatprep.subr.mxu0 0.0
        %261 = vmatpush2.msra.mxu0 0.0
        %262 = vmatprep.subr.mxu0 0.0
        %263 = vmatpush2.msra.mxu0 0.0
        %264 = vmatprep.mubr.f32.mxu0 0.0
        %v265 = vand.u32 %v193, 4294901760
        %v266 = vsub.f32 %v193, %v265
        %v267 = vand.u32 %v266, 4294901760
        %v268 = vsub.f32 %v266, %v267
        %v269 = vand.u32 %v268, 4294901760
        %270 = vmatmul.mubr.f32.gmra.mxu0 %v269
        %v271 = vpop.f32.mrf.mxu0
        %v272 = vadd.f32 0.0, %v271
        %v273 = vpop.f32.mrf.mxu0
        %274 = vmatprep.mubr.f32.mxu0 0.0
        %v275 = vand.u32 %v196, 4294901760
        %v276 = vsub.f32 %v196, %v275
        %v277 = vand.u32 %v276, 4294901760
        %v278 = vsub.f32 %v276, %v277
        %v279 = vand.u32 %v278, 4294901760
        %280 = vmatmul.mubr.f32.gmra.mxu0 %v279
        %v281 = vpop.f32.mrf.mxu0
        %v282 = vadd.f32 0.0, %v281
        %v283 = vpop.f32.mrf.mxu0
        %284 = vdwg.mxu0
        %285 = vmatprep.subr.mxu0 0.0
        %286 = vmatpush1.msra.mxu0 0.0
        %287 = vmatprep.subr.mxu0 0.0
        %288 = vmatpush1.msra.mxu0 0.0
        %289 = vmatprep.subr.mxu0 0.0
        %290 = vmatpush1.msra.mxu0 0.0
        %291 = vmatprep.subr.mxu0 0.0
        %292 = vmatpush1.msra.mxu0 0.0
        %293 = vmatprep.subr.mxu0 0.0
        %294 = vmatpush1.msra.mxu0 0.0
        %295 = vmatprep.subr.mxu0 0.0
        %296 = vmatpush1.msra.mxu0 0.0
        %297 = vmatprep.subr.mxu0 0.0
        %298 = vmatpush1.msra.mxu0 0.0
        %299 = vmatprep.subr.mxu0 0.0
        %300 = vmatpush1.msra.mxu0 0.0
        %301 = vmatprep.subr.mxu0 0.0
        %302 = vmatpush1.msra.mxu0 0.0
        %303 = vmatprep.subr.mxu0 0.0
        %304 = vmatpush1.msra.mxu0 0.0
        %305 = vmatprep.subr.mxu0 0.0
        %306 = vmatpush1.msra.mxu0 0.0
        %307 = vmatprep.subr.mxu0 0.0
        %308 = vmatpush1.msra.mxu0 0.0
        %309 = vmatprep.subr.mxu0 0.0
        %310 = vmatpush1.msra.mxu0 0.0
        %311 = vmatprep.subr.mxu0 0.0
        %312 = vmatpush1.msra.mxu0 0.0
        %313 = vmatprep.subr.mxu0 0.0
        %v314 = vand.u32 %v170, 4294901760
        %v315 = vsub.f32 %v170, %v314
        %v316 = vand.u32 %v315, 4294901760
        %v317 = vsub.f32 %v315, %v316
        %v318 = vand.u32 %v317, 4294901760
        %319 = vmatpush1.msra.mxu0 %v318
        %320 = vmatprep.subr.mxu0 0.0
        %v321 = vand.u32 %v169, 4294901760
        %v322 = vsub.f32 %v169, %v321
        %v323 = vand.u32 %v322, 4294901760
        %v324 = vsub.f32 %v322, %v323
        %v325 = vand.u32 %v324, 4294901760
        %326 = vmatpush1.msra.mxu0 %v325
        %327 = vmatprep.subr.mxu0 0.0
        %328 = vmatpush2.msra.mxu0 0.0
        %329 = vmatprep.subr.mxu0 0.0
        %330 = vmatpush2.msra.mxu0 0.0
        %331 = vmatprep.subr.mxu0 0.0
        %332 = vmatpush2.msra.mxu0 0.0
        %333 = vmatprep.subr.mxu0 0.0
        %334 = vmatpush2.msra.mxu0 0.0
        %335 = vmatprep.subr.mxu0 0.0
        %336 = vmatpush2.msra.mxu0 0.0
        %337 = vmatprep.subr.mxu0 0.0
        %338 = vmatpush2.msra.mxu0 0.0
        %339 = vmatprep.subr.mxu0 0.0
        %340 = vmatpush2.msra.mxu0 0.0
        %341 = vmatprep.subr.mxu0 0.0
        %342 = vmatpush2.msra.mxu0 0.0
        %343 = vmatprep.subr.mxu0 0.0
        %344 = vmatpush2.msra.mxu0 0.0
        %345 = vmatprep.subr.mxu0 0.0
        %346 = vmatpush2.msra.mxu0 0.0
        %347 = vmatprep.subr.mxu0 0.0
        %348 = vmatpush2.msra.mxu0 0.0
        %349 = vmatprep.subr.mxu0 0.0
        %350 = vmatpush2.msra.mxu0 0.0
        %351 = vmatprep.subr.mxu0 0.0
        %352 = vmatpush2.msra.mxu0 0.0
        %353 = vmatprep.subr.mxu0 0.0
        %354 = vmatpush2.msra.mxu0 0.0
        %355 = vmatprep.subr.mxu0 0.0
        %356 = vmatpush2.msra.mxu0 0.0
        %357 = vmatprep.subr.mxu0 0.0
        %358 = vmatpush2.msra.mxu0 0.0
        %359 = vmatprep.mubr.f32.mxu0 0.0
        %v360 = vand.u32 %v193, 4294901760
        %361 = vmatmul.mubr.f32.gmra.mxu0 %v360
        %v362 = vpop.f32.mrf.mxu0
        %v363 = vadd.f32 %v272, %v362
        %v364 = vpop.f32.mrf.mxu0
        %365 = vmatprep.mubr.f32.mxu0 0.0
        %v366 = vand.u32 %v196, 4294901760
        %367 = vmatmul.mubr.f32.gmra.mxu0 %v366
        %v368 = vpop.f32.mrf.mxu0
        %v369 = vadd.f32 %v282, %v368
        %v370 = vpop.f32.mrf.mxu0
        %371 = vdwg.mxu0
        %372 = vmatprep.subr.mxu0 0.0
        %373 = vmatpush1.msra.mxu0 0.0
        %374 = vmatprep.subr.mxu0 0.0
        %375 = vmatpush1.msra.mxu0 0.0
        %376 = vmatprep.subr.mxu0 0.0
        %377 = vmatpush1.msra.mxu0 0.0
        %378 = vmatprep.subr.mxu0 0.0
        %379 = vmatpush1.msra.mxu0 0.0
        %380 = vmatprep.subr.mxu0 0.0
        %381 = vmatpush1.msra.mxu0 0.0
        %382 = vmatprep.subr.mxu0 0.0
        %383 = vmatpush1.msra.mxu0 0.0
        %384 = vmatprep.subr.mxu0 0.0
        %385 = vmatpush1.msra.mxu0 0.0
        %386 = vmatprep.subr.mxu0 0.0
        %387 = vmatpush1.msra.mxu0 0.0
        %388 = vmatprep.subr.mxu0 0.0
        %389 = vmatpush1.msra.mxu0 0.0
        %390 = vmatprep.subr.mxu0 0.0
        %391 = vmatpush1.msra.mxu0 0.0
        %392 = vmatprep.subr.mxu0 0.0
        %393 = vmatpush1.msra.mxu0 0.0
        %394 = vmatprep.subr.mxu0 0.0
        %395 = vmatpush1.msra.mxu0 0.0
        %396 = vmatprep.subr.mxu0 0.0
        %397 = vmatpush1.msra.mxu0 0.0
        %398 = vmatprep.subr.mxu0 0.0
        %399 = vmatpush1.msra.mxu0 0.0
        %400 = vmatprep.subr.mxu0 0.0
        %v401 = vand.u32 %v170, 4294901760
        %v402 = vsub.f32 %v170, %v401
        %403 = vmatpush1.msra.mxu0 %v402
        %404 = vmatprep.subr.mxu0 0.0
        %v405 = vand.u32 %v169, 4294901760
        %v406 = vsub.f32 %v169, %v405
        %407 = vmatpush1.msra.mxu0 %v406
        %408 = vmatprep.subr.mxu0 0.0
        %409 = vmatpush2.msra.mxu0 0.0
        %410 = vmatprep.subr.mxu0 0.0
        %411 = vmatpush2.msra.mxu0 0.0
        %412 = vmatprep.subr.mxu0 0.0
        %413 = vmatpush2.msra.mxu0 0.0
        %414 = vmatprep.subr.mxu0 0.0
        %415 = vmatpush2.msra.mxu0 0.0
        %416 = vmatprep.subr.mxu0 0.0
        %417 = vmatpush2.msra.mxu0 0.0
        %418 = vmatprep.subr.mxu0 0.0
        %419 = vmatpush2.msra.mxu0 0.0
        %420 = vmatprep.subr.mxu0 0.0
        %421 = vmatpush2.msra.mxu0 0.0
        %422 = vmatprep.subr.mxu0 0.0
        %423 = vmatpush2.msra.mxu0 0.0
        %424 = vmatprep.subr.mxu0 0.0
        %425 = vmatpush2.msra.mxu0 0.0
        %426 = vmatprep.subr.mxu0 0.0
        %427 = vmatpush2.msra.mxu0 0.0
        %428 = vmatprep.subr.mxu0 0.0
        %429 = vmatpush2.msra.mxu0 0.0
        %430 = vmatprep.subr.mxu0 0.0
        %431 = vmatpush2.msra.mxu0 0.0
        %432 = vmatprep.subr.mxu0 0.0
        %433 = vmatpush2.msra.mxu0 0.0
        %434 = vmatprep.subr.mxu0 0.0
        %435 = vmatpush2.msra.mxu0 0.0
        %436 = vmatprep.subr.mxu0 0.0
        %437 = vmatpush2.msra.mxu0 0.0
        %438 = vmatprep.subr.mxu0 0.0
        %439 = vmatpush2.msra.mxu0 0.0
        %440 = vmatprep.mubr.f32.mxu0 0.0
        %v441 = vand.u32 %v193, 4294901760
        %v442 = vsub.f32 %v193, %v441
        %443 = vmatmul.mubr.f32.gmra.mxu0 %v442
        %v444 = vpop.f32.mrf.mxu0
        %v445 = vadd.f32 %v363, %v444
        %v446 = vpop.f32.mrf.mxu0
        %447 = vmatprep.mubr.f32.mxu0 0.0
        %v448 = vand.u32 %v196, 4294901760
        %v449 = vsub.f32 %v196, %v448
        %450 = vmatmul.mubr.f32.gmra.mxu0 %v449
        %v451 = vpop.f32.mrf.mxu0
        %v452 = vadd.f32 %v369, %v451
        %v453 = vpop.f32.mrf.mxu0
        %454 = vdwg.mxu0
        %455 = vmatprep.subr.mxu0 0.0
        %456 = vmatpush1.msra.mxu0 0.0
        %457 = vmatprep.subr.mxu0 0.0
        %458 = vmatpush1.msra.mxu0 0.0
        %459 = vmatprep.subr.mxu0 0.0
        %460 = vmatpush1.msra.mxu0 0.0
        %461 = vmatprep.subr.mxu0 0.0
        %462 = vmatpush1.msra.mxu0 0.0
        %463 = vmatprep.subr.mxu0 0.0
        %464 = vmatpush1.msra.mxu0 0.0
        %465 = vmatprep.subr.mxu0 0.0
        %466 = vmatpush1.msra.mxu0 0.0
        %467 = vmatprep.subr.mxu0 0.0
        %468 = vmatpush1.msra.mxu0 0.0
        %469 = vmatprep.subr.mxu0 0.0
        %470 = vmatpush1.msra.mxu0 0.0
        %471 = vmatprep.subr.mxu0 0.0
        %472 = vmatpush1.msra.mxu0 0.0
        %473 = vmatprep.subr.mxu0 0.0
        %474 = vmatpush1.msra.mxu0 0.0
        %475 = vmatprep.subr.mxu0 0.0
        %476 = vmatpush1.msra.mxu0 0.0
        %477 = vmatprep.subr.mxu0 0.0
        %478 = vmatpush1.msra.mxu0 0.0
        %479 = vmatprep.subr.mxu0 0.0
        %480 = vmatpush1.msra.mxu0 0.0
        %481 = vmatprep.subr.mxu0 0.0
        %482 = vmatpush1.msra.mxu0 0.0
        %483 = vmatprep.subr.mxu0 0.0
        %v484 = vand.u32 %v170, 4294901760
        %485 = vmatpush1.msra.mxu0 %v484
        %486 = vmatprep.subr.mxu0 0.0
        %v487 = vand.u32 %v169, 4294901760
        %488 = vmatpush1.msra.mxu0 %v487
        %489 = vmatprep.subr.mxu0 0.0
        %490 = vmatpush2.msra.mxu0 0.0
        %491 = vmatprep.subr.mxu0 0.0
        %492 = vmatpush2.msra.mxu0 0.0
        %493 = vmatprep.subr.mxu0 0.0
        %494 = vmatpush2.msra.mxu0 0.0
        %495 = vmatprep.subr.mxu0 0.0
        %496 = vmatpush2.msra.mxu0 0.0
        %497 = vmatprep.subr.mxu0 0.0
        %498 = vmatpush2.msra.mxu0 0.0
        %499 = vmatprep.subr.mxu0 0.0
        %500 = vmatpush2.msra.mxu0 0.0
        %501 = vmatprep.subr.mxu0 0.0
        %502 = vmatpush2.msra.mxu0 0.0
        %503 = vmatprep.subr.mxu0 0.0
        %504 = vmatpush2.msra.mxu0 0.0
        %505 = vmatprep.subr.mxu0 0.0
        %506 = vmatpush2.msra.mxu0 0.0
        %507 = vmatprep.subr.mxu0 0.0
        %508 = vmatpush2.msra.mxu0 0.0
        %509 = vmatprep.subr.mxu0 0.0
        %510 = vmatpush2.msra.mxu0 0.0
        %511 = vmatprep.subr.mxu0 0.0
        %512 = vmatpush2.msra.mxu0 0.0
        %513 = vmatprep.subr.mxu0 0.0
        %514 = vmatpush2.msra.mxu0 0.0
        %515 = vmatprep.subr.mxu0 0.0
        %516 = vmatpush2.msra.mxu0 0.0
        %517 = vmatprep.subr.mxu0 0.0
        %518 = vmatpush2.msra.mxu0 0.0
        %519 = vmatprep.subr.mxu0 0.0
        %520 = vmatpush2.msra.mxu0 0.0
        %521 = vmatprep.mubr.f32.mxu0 0.0
        %v522 = vand.u32 %v193, 4294901760
        %v523 = vsub.f32 %v193, %v522
        %v524 = vand.u32 %v523, 4294901760
        %525 = vmatmul.mubr.f32.gmra.mxu0 %v524
        %v526 = vpop.f32.mrf.mxu0
        %v527 = vadd.f32 %v445, %v526
        %v528 = vpop.f32.mrf.mxu0
        %529 = vmatprep.mubr.f32.mxu0 0.0
        %v530 = vand.u32 %v196, 4294901760
        %v531 = vsub.f32 %v196, %v530
        %v532 = vand.u32 %v531, 4294901760
        %533 = vmatmul.mubr.f32.gmra.mxu0 %v532
        %v534 = vpop.f32.mrf.mxu0
        %v535 = vadd.f32 %v452, %v534
        %v536 = vpop.f32.mrf.mxu0
        %537 = vdwg.mxu0
        %538 = vmatprep.subr.mxu0 0.0
        %539 = vmatpush1.msra.mxu0 0.0
        %540 = vmatprep.subr.mxu0 0.0
        %541 = vmatpush1.msra.mxu0 0.0
        %542 = vmatprep.subr.mxu0 0.0
        %543 = vmatpush1.msra.mxu0 0.0
        %544 = vmatprep.subr.mxu0 0.0
        %545 = vmatpush1.msra.mxu0 0.0
        %546 = vmatprep.subr.mxu0 0.0
        %547 = vmatpush1.msra.mxu0 0.0
        %548 = vmatprep.subr.mxu0 0.0
        %549 = vmatpush1.msra.mxu0 0.0
        %550 = vmatprep.subr.mxu0 0.0
        %551 = vmatpush1.msra.mxu0 0.0
        %552 = vmatprep.subr.mxu0 0.0
        %553 = vmatpush1.msra.mxu0 0.0
        %554 = vmatprep.subr.mxu0 0.0
        %555 = vmatpush1.msra.mxu0 0.0
        %556 = vmatprep.subr.mxu0 0.0
        %557 = vmatpush1.msra.mxu0 0.0
        %558 = vmatprep.subr.mxu0 0.0
        %559 = vmatpush1.msra.mxu0 0.0
        %560 = vmatprep.subr.mxu0 0.0
        %561 = vmatpush1.msra.mxu0 0.0
        %562 = vmatprep.subr.mxu0 0.0
        %563 = vmatpush1.msra.mxu0 0.0
        %564 = vmatprep.subr.mxu0 0.0
        %565 = vmatpush1.msra.mxu0 0.0
        %566 = vmatprep.subr.mxu0 0.0
        %v567 = vand.u32 %v170, 4294901760
        %v568 = vsub.f32 %v170, %v567
        %v569 = vand.u32 %v568, 4294901760
        %570 = vmatpush1.msra.mxu0 %v569
        %571 = vmatprep.subr.mxu0 0.0
        %v572 = vand.u32 %v169, 4294901760
        %v573 = vsub.f32 %v169, %v572
        %v574 = vand.u32 %v573, 4294901760
        %575 = vmatpush1.msra.mxu0 %v574
        %576 = vmatprep.subr.mxu0 0.0
        %577 = vmatpush2.msra.mxu0 0.0
        %578 = vmatprep.subr.mxu0 0.0
        %579 = vmatpush2.msra.mxu0 0.0
        %580 = vmatprep.subr.mxu0 0.0
        %581 = vmatpush2.msra.mxu0 0.0
        %582 = vmatprep.subr.mxu0 0.0
        %583 = vmatpush2.msra.mxu0 0.0
        %584 = vmatprep.subr.mxu0 0.0
        %585 = vmatpush2.msra.mxu0 0.0
        %586 = vmatprep.subr.mxu0 0.0
        %587 = vmatpush2.msra.mxu0 0.0
        %588 = vmatprep.subr.mxu0 0.0
        %589 = vmatpush2.msra.mxu0 0.0
        %590 = vmatprep.subr.mxu0 0.0
        %591 = vmatpush2.msra.mxu0 0.0
        %592 = vmatprep.subr.mxu0 0.0
        %593 = vmatpush2.msra.mxu0 0.0
        %594 = vmatprep.subr.mxu0 0.0
        %595 = vmatpush2.msra.mxu0 0.0
        %596 = vmatprep.subr.mxu0 0.0
        %597 = vmatpush2.msra.mxu0 0.0
        %598 = vmatprep.subr.mxu0 0.0
        %599 = vmatpush2.msra.mxu0 0.0
        %600 = vmatprep.subr.mxu0 0.0
        %601 = vmatpush2.msra.mxu0 0.0
        %602 = vmatprep.subr.mxu0 0.0
        %603 = vmatpush2.msra.mxu0 0.0
        %604 = vmatprep.subr.mxu0 0.0
        %605 = vmatpush2.msra.mxu0 0.0
        %606 = vmatprep.subr.mxu0 0.0
        %607 = vmatpush2.msra.mxu0 0.0
        %608 = vmatprep.mubr.f32.mxu0 0.0
        %v609 = vand.u32 %v193, 4294901760
        %610 = vmatmul.mubr.f32.gmra.mxu0 %v609
        %v611 = vpop.f32.mrf.mxu0
        %v612 = vadd.f32 %v527, %v611
        %v613 = vpop.f32.mrf.mxu0
        %614 = vmatprep.mubr.f32.mxu0 0.0
        %v615 = vand.u32 %v196, 4294901760
        %616 = vmatmul.mubr.f32.gmra.mxu0 %v615
        %v617 = vpop.f32.mrf.mxu0
        %v618 = vadd.f32 %v535, %v617
        %v619 = vpop.f32.mrf.mxu0
        %620 = vdwg.mxu0
        %621 = vmatprep.subr.mxu0 0.0
        %622 = vmatpush1.msra.mxu0 0.0
        %623 = vmatprep.subr.mxu0 0.0
        %624 = vmatpush1.msra.mxu0 0.0
        %625 = vmatprep.subr.mxu0 0.0
        %626 = vmatpush1.msra.mxu0 0.0
        %627 = vmatprep.subr.mxu0 0.0
        %628 = vmatpush1.msra.mxu0 0.0
        %629 = vmatprep.subr.mxu0 0.0
        %630 = vmatpush1.msra.mxu0 0.0
        %631 = vmatprep.subr.mxu0 0.0
        %632 = vmatpush1.msra.mxu0 0.0
        %633 = vmatprep.subr.mxu0 0.0
        %634 = vmatpush1.msra.mxu0 0.0
        %635 = vmatprep.subr.mxu0 0.0
        %636 = vmatpush1.msra.mxu0 0.0
        %637 = vmatprep.subr.mxu0 0.0
        %638 = vmatpush1.msra.mxu0 0.0
        %639 = vmatprep.subr.mxu0 0.0
        %640 = vmatpush1.msra.mxu0 0.0
        %641 = vmatprep.subr.mxu0 0.0
        %642 = vmatpush1.msra.mxu0 0.0
        %643 = vmatprep.subr.mxu0 0.0
        %644 = vmatpush1.msra.mxu0 0.0
        %645 = vmatprep.subr.mxu0 0.0
        %646 = vmatpush1.msra.mxu0 0.0
        %647 = vmatprep.subr.mxu0 0.0
        %648 = vmatpush1.msra.mxu0 0.0
        %649 = vmatprep.subr.mxu0 0.0
        %v650 = vand.u32 %v170, 4294901760
        %651 = vmatpush1.msra.mxu0 %v650
        %652 = vmatprep.subr.mxu0 0.0
        %v653 = vand.u32 %v169, 4294901760
        %654 = vmatpush1.msra.mxu0 %v653
        %655 = vmatprep.subr.mxu0 0.0
        %656 = vmatpush2.msra.mxu0 0.0
        %657 = vmatprep.subr.mxu0 0.0
        %658 = vmatpush2.msra.mxu0 0.0
        %659 = vmatprep.subr.mxu0 0.0
        %660 = vmatpush2.msra.mxu0 0.0
        %661 = vmatprep.subr.mxu0 0.0
        %662 = vmatpush2.msra.mxu0 0.0
        %663 = vmatprep.subr.mxu0 0.0
        %664 = vmatpush2.msra.mxu0 0.0
        %665 = vmatprep.subr.mxu0 0.0
        %666 = vmatpush2.msra.mxu0 0.0
        %667 = vmatprep.subr.mxu0 0.0
        %668 = vmatpush2.msra.mxu0 0.0
        %669 = vmatprep.subr.mxu0 0.0
        %670 = vmatpush2.msra.mxu0 0.0
        %671 = vmatprep.subr.mxu0 0.0
        %672 = vmatpush2.msra.mxu0 0.0
        %673 = vmatprep.subr.mxu0 0.0
        %674 = vmatpush2.msra.mxu0 0.0
        %675 = vmatprep.subr.mxu0 0.0
        %676 = vmatpush2.msra.mxu0 0.0
        %677 = vmatprep.subr.mxu0 0.0
        %678 = vmatpush2.msra.mxu0 0.0
        %679 = vmatprep.subr.mxu0 0.0
        %680 = vmatpush2.msra.mxu0 0.0
        %681 = vmatprep.subr.mxu0 0.0
        %682 = vmatpush2.msra.mxu0 0.0
        %683 = vmatprep.subr.mxu0 0.0
        %684 = vmatpush2.msra.mxu0 0.0
        %685 = vmatprep.subr.mxu0 0.0
        %686 = vmatpush2.msra.mxu0 0.0
        %687 = vmatprep.mubr.f32.mxu0 0.0
        %v688 = vand.u32 %v193, 4294901760
        %689 = vmatmul.mubr.f32.gmra.mxu0 %v688
        %v690 = vpop.f32.mrf.mxu0
        %v691 = vadd.f32 %v612, %v690
        %v692 = vpop.f32.mrf.mxu0
        %693 = vmatprep.mubr.f32.mxu0 0.0
        %v694 = vand.u32 %v196, 4294901760
        %695 = vmatmul.mubr.f32.gmra.mxu0 %v694
        %v696 = vpop.f32.mrf.mxu0
        %v697 = vadd.f32 %v618, %v696
        %v698 = vpop.f32.mrf.mxu0
        %699 = vdwg.mxu0
        %702 = vrot.lane.b32.xlu0 %v189, 112
        %v703 = vpop.permute.xlu0 %702
        %704 = vrot.lane.b32.xlu0 %v190, 112
        %v705 = vpop.permute.xlu0 %704
        %v706 = vsel %vm191, %v703, 0
        %v708 = vsel %vm191, %v705, 0
        %710 = vmatprep.subr.mxu0 0.0
        %711 = vmatpush1.msra.mxu0 0.0
        %712 = vmatprep.subr.mxu0 0.0
        %713 = vmatpush1.msra.mxu0 0.0
        %714 = vmatprep.subr.mxu0 0.0
        %715 = vmatpush1.msra.mxu0 0.0
        %716 = vmatprep.subr.mxu0 0.0
        %717 = vmatpush1.msra.mxu0 0.0
        %718 = vmatprep.subr.mxu0 0.0
        %719 = vmatpush1.msra.mxu0 0.0
        %720 = vmatprep.subr.mxu0 0.0
        %721 = vmatpush1.msra.mxu0 0.0
        %722 = vmatprep.subr.mxu0 0.0
        %723 = vmatpush1.msra.mxu0 0.0
        %724 = vmatprep.subr.mxu0 0.0
        %725 = vmatpush1.msra.mxu0 0.0
        %726 = vmatprep.subr.mxu0 0.0
        %727 = vmatpush1.msra.mxu0 0.0
        %728 = vmatprep.subr.mxu0 0.0
        %729 = vmatpush1.msra.mxu0 0.0
        %730 = vmatprep.subr.mxu0 0.0
        %731 = vmatpush1.msra.mxu0 0.0
        %732 = vmatprep.subr.mxu0 0.0
        %733 = vmatpush1.msra.mxu0 0.0
        %734 = vmatprep.subr.mxu0 0.0
        %735 = vmatpush1.msra.mxu0 0.0
        %736 = vmatprep.subr.mxu0 0.0
        %737 = vmatpush1.msra.mxu0 0.0
        %738 = vmatprep.subr.mxu0 0.0
        %v739 = vand.u32 %v170, 4294901760
        %740 = vmatpush1.msra.mxu0 %v739
        %741 = vmatprep.subr.mxu0 0.0
        %v742 = vand.u32 %v169, 4294901760
        %743 = vmatpush1.msra.mxu0 %v742
        %744 = vmatprep.subr.mxu0 0.0
        %745 = vmatpush2.msra.mxu0 0.0
        %746 = vmatprep.subr.mxu0 0.0
        %747 = vmatpush2.msra.mxu0 0.0
        %748 = vmatprep.subr.mxu0 0.0
        %749 = vmatpush2.msra.mxu0 0.0
        %750 = vmatprep.subr.mxu0 0.0
        %751 = vmatpush2.msra.mxu0 0.0
        %752 = vmatprep.subr.mxu0 0.0
        %753 = vmatpush2.msra.mxu0 0.0
        %754 = vmatprep.subr.mxu0 0.0
        %755 = vmatpush2.msra.mxu0 0.0
        %756 = vmatprep.subr.mxu0 0.0
        %757 = vmatpush2.msra.mxu0 0.0
        %758 = vmatprep.subr.mxu0 0.0
        %759 = vmatpush2.msra.mxu0 0.0
        %760 = vmatprep.subr.mxu0 0.0
        %761 = vmatpush2.msra.mxu0 0.0
        %762 = vmatprep.subr.mxu0 0.0
        %763 = vmatpush2.msra.mxu0 0.0
        %764 = vmatprep.subr.mxu0 0.0
        %765 = vmatpush2.msra.mxu0 0.0
        %766 = vmatprep.subr.mxu0 0.0
        %767 = vmatpush2.msra.mxu0 0.0
        %768 = vmatprep.subr.mxu0 0.0
        %769 = vmatpush2.msra.mxu0 0.0
        %770 = vmatprep.subr.mxu0 0.0
        %771 = vmatpush2.msra.mxu0 0.0
        %772 = vmatprep.subr.mxu0 0.0
        %773 = vmatpush2.msra.mxu0 0.0
        %774 = vmatprep.subr.mxu0 0.0
        %775 = vmatpush2.msra.mxu0 0.0
        %776 = vmatprep.mubr.f32.mxu0 0.0
        %v777 = vand.u32 %v706, 4294901760
        %v778 = vsub.f32 %v706, %v777
        %v779 = vand.u32 %v778, 4294901760
        %v780 = vsub.f32 %v778, %v779
        %v781 = vand.u32 %v780, 4294901760
        %782 = vmatmul.mubr.f32.gmra.mxu0 %v781
        %v783 = vpop.f32.mrf.mxu0
        %v784 = vadd.f32 0.0, %v783
        %v785 = vpop.f32.mrf.mxu0
        %786 = vmatprep.mubr.f32.mxu0 0.0
        %v787 = vand.u32 %v708, 4294901760
        %v788 = vsub.f32 %v708, %v787
        %v789 = vand.u32 %v788, 4294901760
        %v790 = vsub.f32 %v788, %v789
        %v791 = vand.u32 %v790, 4294901760
        %792 = vmatmul.mubr.f32.gmra.mxu0 %v791
        %v793 = vpop.f32.mrf.mxu0
        %v794 = vadd.f32 0.0, %v793
        %v795 = vpop.f32.mrf.mxu0
        %796 = vdwg.mxu0
        %797 = vmatprep.subr.mxu0 0.0
        %798 = vmatpush1.msra.mxu0 0.0
        %799 = vmatprep.subr.mxu0 0.0
        %800 = vmatpush1.msra.mxu0 0.0
        %801 = vmatprep.subr.mxu0 0.0
        %802 = vmatpush1.msra.mxu0 0.0
        %803 = vmatprep.subr.mxu0 0.0
        %804 = vmatpush1.msra.mxu0 0.0
        %805 = vmatprep.subr.mxu0 0.0
        %806 = vmatpush1.msra.mxu0 0.0
        %807 = vmatprep.subr.mxu0 0.0
        %808 = vmatpush1.msra.mxu0 0.0
        %809 = vmatprep.subr.mxu0 0.0
        %810 = vmatpush1.msra.mxu0 0.0
        %811 = vmatprep.subr.mxu0 0.0
        %812 = vmatpush1.msra.mxu0 0.0
        %813 = vmatprep.subr.mxu0 0.0
        %814 = vmatpush1.msra.mxu0 0.0
        %815 = vmatprep.subr.mxu0 0.0
        %816 = vmatpush1.msra.mxu0 0.0
        %817 = vmatprep.subr.mxu0 0.0
        %818 = vmatpush1.msra.mxu0 0.0
        %819 = vmatprep.subr.mxu0 0.0
        %820 = vmatpush1.msra.mxu0 0.0
        %821 = vmatprep.subr.mxu0 0.0
        %822 = vmatpush1.msra.mxu0 0.0
        %823 = vmatprep.subr.mxu0 0.0
        %824 = vmatpush1.msra.mxu0 0.0
        %825 = vmatprep.subr.mxu0 0.0
        %v826 = vand.u32 %v170, 4294901760
        %v827 = vsub.f32 %v170, %v826
        %v828 = vand.u32 %v827, 4294901760
        %v829 = vsub.f32 %v827, %v828
        %v830 = vand.u32 %v829, 4294901760
        %831 = vmatpush1.msra.mxu0 %v830
        %832 = vmatprep.subr.mxu0 0.0
        %v833 = vand.u32 %v169, 4294901760
        %v834 = vsub.f32 %v169, %v833
        %v835 = vand.u32 %v834, 4294901760
        %v836 = vsub.f32 %v834, %v835
        %v837 = vand.u32 %v836, 4294901760
        %838 = vmatpush1.msra.mxu0 %v837
        %839 = vmatprep.subr.mxu0 0.0
        %840 = vmatpush2.msra.mxu0 0.0
        %841 = vmatprep.subr.mxu0 0.0
        %842 = vmatpush2.msra.mxu0 0.0
        %843 = vmatprep.subr.mxu0 0.0
        %844 = vmatpush2.msra.mxu0 0.0
        %845 = vmatprep.subr.mxu0 0.0
        %846 = vmatpush2.msra.mxu0 0.0
        %847 = vmatprep.subr.mxu0 0.0
        %848 = vmatpush2.msra.mxu0 0.0
        %849 = vmatprep.subr.mxu0 0.0
        %850 = vmatpush2.msra.mxu0 0.0
        %851 = vmatprep.subr.mxu0 0.0
        %852 = vmatpush2.msra.mxu0 0.0
        %853 = vmatprep.subr.mxu0 0.0
        %854 = vmatpush2.msra.mxu0 0.0
        %855 = vmatprep.subr.mxu0 0.0
        %856 = vmatpush2.msra.mxu0 0.0
        %857 = vmatprep.subr.mxu0 0.0
        %858 = vmatpush2.msra.mxu0 0.0
        %859 = vmatprep.subr.mxu0 0.0
        %860 = vmatpush2.msra.mxu0 0.0
        %861 = vmatprep.subr.mxu0 0.0
        %862 = vmatpush2.msra.mxu0 0.0
        %863 = vmatprep.subr.mxu0 0.0
        %864 = vmatpush2.msra.mxu0 0.0
        %865 = vmatprep.subr.mxu0 0.0
        %866 = vmatpush2.msra.mxu0 0.0
        %867 = vmatprep.subr.mxu0 0.0
        %868 = vmatpush2.msra.mxu0 0.0
        %869 = vmatprep.subr.mxu0 0.0
        %870 = vmatpush2.msra.mxu0 0.0
        %871 = vmatprep.mubr.f32.mxu0 0.0
        %v872 = vand.u32 %v706, 4294901760
        %873 = vmatmul.mubr.f32.gmra.mxu0 %v872
        %v874 = vpop.f32.mrf.mxu0
        %v875 = vadd.f32 %v784, %v874
        %v876 = vpop.f32.mrf.mxu0
        %877 = vmatprep.mubr.f32.mxu0 0.0
        %v878 = vand.u32 %v708, 4294901760
        %879 = vmatmul.mubr.f32.gmra.mxu0 %v878
        %v880 = vpop.f32.mrf.mxu0
        %v881 = vadd.f32 %v794, %v880
        %v882 = vpop.f32.mrf.mxu0
        %883 = vdwg.mxu0
        %884 = vmatprep.subr.mxu0 0.0
        %885 = vmatpush1.msra.mxu0 0.0
        %886 = vmatprep.subr.mxu0 0.0
        %887 = vmatpush1.msra.mxu0 0.0
        %888 = vmatprep.subr.mxu0 0.0
        %889 = vmatpush1.msra.mxu0 0.0
        %890 = vmatprep.subr.mxu0 0.0
        %891 = vmatpush1.msra.mxu0 0.0
        %892 = vmatprep.subr.mxu0 0.0
        %893 = vmatpush1.msra.mxu0 0.0
        %894 = vmatprep.subr.mxu0 0.0
        %895 = vmatpush1.msra.mxu0 0.0
        %896 = vmatprep.subr.mxu0 0.0
        %897 = vmatpush1.msra.mxu0 0.0
        %898 = vmatprep.subr.mxu0 0.0
        %899 = vmatpush1.msra.mxu0 0.0
        %900 = vmatprep.subr.mxu0 0.0
        %901 = vmatpush1.msra.mxu0 0.0
        %902 = vmatprep.subr.mxu0 0.0
        %903 = vmatpush1.msra.mxu0 0.0
        %904 = vmatprep.subr.mxu0 0.0
        %905 = vmatpush1.msra.mxu0 0.0
        %906 = vmatprep.subr.mxu0 0.0
        %907 = vmatpush1.msra.mxu0 0.0
        %908 = vmatprep.subr.mxu0 0.0
        %909 = vmatpush1.msra.mxu0 0.0
        %910 = vmatprep.subr.mxu0 0.0
        %911 = vmatpush1.msra.mxu0 0.0
        %912 = vmatprep.subr.mxu0 0.0
        %v913 = vand.u32 %v170, 4294901760
        %v914 = vsub.f32 %v170, %v913
        %915 = vmatpush1.msra.mxu0 %v914
        %916 = vmatprep.subr.mxu0 0.0
        %v917 = vand.u32 %v169, 4294901760
        %v918 = vsub.f32 %v169, %v917
        %919 = vmatpush1.msra.mxu0 %v918
        %920 = vmatprep.subr.mxu0 0.0
        %921 = vmatpush2.msra.mxu0 0.0
        %922 = vmatprep.subr.mxu0 0.0
        %923 = vmatpush2.msra.mxu0 0.0
        %924 = vmatprep.subr.mxu0 0.0
        %925 = vmatpush2.msra.mxu0 0.0
        %926 = vmatprep.subr.mxu0 0.0
        %927 = vmatpush2.msra.mxu0 0.0
        %928 = vmatprep.subr.mxu0 0.0
        %929 = vmatpush2.msra.mxu0 0.0
        %930 = vmatprep.subr.mxu0 0.0
        %931 = vmatpush2.msra.mxu0 0.0
        %932 = vmatprep.subr.mxu0 0.0
        %933 = vmatpush2.msra.mxu0 0.0
        %934 = vmatprep.subr.mxu0 0.0
        %935 = vmatpush2.msra.mxu0 0.0
        %936 = vmatprep.subr.mxu0 0.0
        %937 = vmatpush2.msra.mxu0 0.0
        %938 = vmatprep.subr.mxu0 0.0
        %939 = vmatpush2.msra.mxu0 0.0
        %940 = vmatprep.subr.mxu0 0.0
        %941 = vmatpush2.msra.mxu0 0.0
        %942 = vmatprep.subr.mxu0 0.0
        %943 = vmatpush2.msra.mxu0 0.0
        %944 = vmatprep.subr.mxu0 0.0
        %945 = vmatpush2.msra.mxu0 0.0
        %946 = vmatprep.subr.mxu0 0.0
        %947 = vmatpush2.msra.mxu0 0.0
        %948 = vmatprep.subr.mxu0 0.0
        %949 = vmatpush2.msra.mxu0 0.0
        %950 = vmatprep.subr.mxu0 0.0
        %951 = vmatpush2.msra.mxu0 0.0
        %952 = vmatprep.mubr.f32.mxu0 0.0
        %v953 = vand.u32 %v706, 4294901760
        %v954 = vsub.f32 %v706, %v953
        %955 = vmatmul.mubr.f32.gmra.mxu0 %v954
        %v956 = vpop.f32.mrf.mxu0
        %v957 = vadd.f32 %v875, %v956
        %v958 = vpop.f32.mrf.mxu0
        %959 = vmatprep.mubr.f32.mxu0 0.0
        %v960 = vand.u32 %v708, 4294901760
        %v961 = vsub.f32 %v708, %v960
        %962 = vmatmul.mubr.f32.gmra.mxu0 %v961
        %v963 = vpop.f32.mrf.mxu0
        %v964 = vadd.f32 %v881, %v963
        %v965 = vpop.f32.mrf.mxu0
        %966 = vdwg.mxu0
        %967 = vmatprep.subr.mxu0 0.0
        %968 = vmatpush1.msra.mxu0 0.0
        %969 = vmatprep.subr.mxu0 0.0
        %970 = vmatpush1.msra.mxu0 0.0
        %971 = vmatprep.subr.mxu0 0.0
        %972 = vmatpush1.msra.mxu0 0.0
        %973 = vmatprep.subr.mxu0 0.0
        %974 = vmatpush1.msra.mxu0 0.0
        %975 = vmatprep.subr.mxu0 0.0
        %976 = vmatpush1.msra.mxu0 0.0
        %977 = vmatprep.subr.mxu0 0.0
        %978 = vmatpush1.msra.mxu0 0.0
        %979 = vmatprep.subr.mxu0 0.0
        %980 = vmatpush1.msra.mxu0 0.0
        %981 = vmatprep.subr.mxu0 0.0
        %982 = vmatpush1.msra.mxu0 0.0
        %983 = vmatprep.subr.mxu0 0.0
        %984 = vmatpush1.msra.mxu0 0.0
        %985 = vmatprep.subr.mxu0 0.0
        %986 = vmatpush1.msra.mxu0 0.0
        %987 = vmatprep.subr.mxu0 0.0
        %988 = vmatpush1.msra.mxu0 0.0
        %989 = vmatprep.subr.mxu0 0.0
        %990 = vmatpush1.msra.mxu0 0.0
        %991 = vmatprep.subr.mxu0 0.0
        %992 = vmatpush1.msra.mxu0 0.0
        %993 = vmatprep.subr.mxu0 0.0
        %994 = vmatpush1.msra.mxu0 0.0
        %995 = vmatprep.subr.mxu0 0.0
        %v996 = vand.u32 %v170, 4294901760
        %997 = vmatpush1.msra.mxu0 %v996
        %998 = vmatprep.subr.mxu0 0.0
        %v999 = vand.u32 %v169, 4294901760
        %1000 = vmatpush1.msra.mxu0 %v999
        %1001 = vmatprep.subr.mxu0 0.0
        %1002 = vmatpush2.msra.mxu0 0.0
        %1003 = vmatprep.subr.mxu0 0.0
        %1004 = vmatpush2.msra.mxu0 0.0
        %1005 = vmatprep.subr.mxu0 0.0
        %1006 = vmatpush2.msra.mxu0 0.0
        %1007 = vmatprep.subr.mxu0 0.0
        %1008 = vmatpush2.msra.mxu0 0.0
        %1009 = vmatprep.subr.mxu0 0.0
        %1010 = vmatpush2.msra.mxu0 0.0
        %1011 = vmatprep.subr.mxu0 0.0
        %1012 = vmatpush2.msra.mxu0 0.0
        %1013 = vmatprep.subr.mxu0 0.0
        %1014 = vmatpush2.msra.mxu0 0.0
        %1015 = vmatprep.subr.mxu0 0.0
        %1016 = vmatpush2.msra.mxu0 0.0
        %1017 = vmatprep.subr.mxu0 0.0
        %1018 = vmatpush2.msra.mxu0 0.0
        %1019 = vmatprep.subr.mxu0 0.0
        %1020 = vmatpush2.msra.mxu0 0.0
        %1021 = vmatprep.subr.mxu0 0.0
        %1022 = vmatpush2.msra.mxu0 0.0
        %1023 = vmatprep.subr.mxu0 0.0
        %1024 = vmatpush2.msra.mxu0 0.0
        %1025 = vmatprep.subr.mxu0 0.0
        %1026 = vmatpush2.msra.mxu0 0.0
        %1027 = vmatprep.subr.mxu0 0.0
        %1028 = vmatpush2.msra.mxu0 0.0
        %1029 = vmatprep.subr.mxu0 0.0
        %1030 = vmatpush2.msra.mxu0 0.0
        %1031 = vmatprep.subr.mxu0 0.0
        %1032 = vmatpush2.msra.mxu0 0.0
        %1033 = vmatprep.mubr.f32.mxu0 0.0
        %v1034 = vand.u32 %v706, 4294901760
        %v1035 = vsub.f32 %v706, %v1034
        %v1036 = vand.u32 %v1035, 4294901760
        %1037 = vmatmul.mubr.f32.gmra.mxu0 %v1036
        %v1038 = vpop.f32.mrf.mxu0
        %v1039 = vadd.f32 %v957, %v1038
        %v1040 = vpop.f32.mrf.mxu0
        %1041 = vmatprep.mubr.f32.mxu0 0.0
        %v1042 = vand.u32 %v708, 4294901760
        %v1043 = vsub.f32 %v708, %v1042
        %v1044 = vand.u32 %v1043, 4294901760
        %1045 = vmatmul.mubr.f32.gmra.mxu0 %v1044
        %v1046 = vpop.f32.mrf.mxu0
        %v1047 = vadd.f32 %v964, %v1046
        %v1048 = vpop.f32.mrf.mxu0
        %1049 = vdwg.mxu0
        %1050 = vmatprep.subr.mxu0 0.0
        %1051 = vmatpush1.msra.mxu0 0.0
        %1052 = vmatprep.subr.mxu0 0.0
        %1053 = vmatpush1.msra.mxu0 0.0
        %1054 = vmatprep.subr.mxu0 0.0
        %1055 = vmatpush1.msra.mxu0 0.0
        %1056 = vmatprep.subr.mxu0 0.0
        %1057 = vmatpush1.msra.mxu0 0.0
        %1058 = vmatprep.subr.mxu0 0.0
        %1059 = vmatpush1.msra.mxu0 0.0
        %1060 = vmatprep.subr.mxu0 0.0
        %1061 = vmatpush1.msra.mxu0 0.0
        %1062 = vmatprep.subr.mxu0 0.0
        %1063 = vmatpush1.msra.mxu0 0.0
        %1064 = vmatprep.subr.mxu0 0.0
        %1065 = vmatpush1.msra.mxu0 0.0
        %1066 = vmatprep.subr.mxu0 0.0
        %1067 = vmatpush1.msra.mxu0 0.0
        %1068 = vmatprep.subr.mxu0 0.0
        %1069 = vmatpush1.msra.mxu0 0.0
        %1070 = vmatprep.subr.mxu0 0.0
        %1071 = vmatpush1.msra.mxu0 0.0
        %1072 = vmatprep.subr.mxu0 0.0
        %1073 = vmatpush1.msra.mxu0 0.0
        %1074 = vmatprep.subr.mxu0 0.0
        %1075 = vmatpush1.msra.mxu0 0.0
        %1076 = vmatprep.subr.mxu0 0.0
        %1077 = vmatpush1.msra.mxu0 0.0
        %1078 = vmatprep.subr.mxu0 0.0
        %v1079 = vand.u32 %v170, 4294901760
        %v1080 = vsub.f32 %v170, %v1079
        %v1081 = vand.u32 %v1080, 4294901760
        %1082 = vmatpush1.msra.mxu0 %v1081
        %1083 = vmatprep.subr.mxu0 0.0
        %v1084 = vand.u32 %v169, 4294901760
        %v1085 = vsub.f32 %v169, %v1084
        %v1086 = vand.u32 %v1085, 4294901760
        %1087 = vmatpush1.msra.mxu0 %v1086
        %1088 = vmatprep.subr.mxu0 0.0
        %1089 = vmatpush2.msra.mxu0 0.0
        %1090 = vmatprep.subr.mxu0 0.0
        %1091 = vmatpush2.msra.mxu0 0.0
        %1092 = vmatprep.subr.mxu0 0.0
        %1093 = vmatpush2.msra.mxu0 0.0
        %1094 = vmatprep.subr.mxu0 0.0
        %1095 = vmatpush2.msra.mxu0 0.0
        %1096 = vmatprep.subr.mxu0 0.0
        %1097 = vmatpush2.msra.mxu0 0.0
        %1098 = vmatprep.subr.mxu0 0.0
        %1099 = vmatpush2.msra.mxu0 0.0
        %1100 = vmatprep.subr.mxu0 0.0
        %1101 = vmatpush2.msra.mxu0 0.0
        %1102 = vmatprep.subr.mxu0 0.0
        %1103 = vmatpush2.msra.mxu0 0.0
        %1104 = vmatprep.subr.mxu0 0.0
        %1105 = vmatpush2.msra.mxu0 0.0
        %1106 = vmatprep.subr.mxu0 0.0
        %1107 = vmatpush2.msra.mxu0 0.0
        %1108 = vmatprep.subr.mxu0 0.0
        %1109 = vmatpush2.msra.mxu0 0.0
        %1110 = vmatprep.subr.mxu0 0.0
        %1111 = vmatpush2.msra.mxu0 0.0
        %1112 = vmatprep.subr.mxu0 0.0
        %1113 = vmatpush2.msra.mxu0 0.0
        %1114 = vmatprep.subr.mxu0 0.0
        %1115 = vmatpush2.msra.mxu0 0.0
        %1116 = vmatprep.subr.mxu0 0.0
        %1117 = vmatpush2.msra.mxu0 0.0
        %1118 = vmatprep.subr.mxu0 0.0
        %1119 = vmatpush2.msra.mxu0 0.0
        %1120 = vmatprep.mubr.f32.mxu0 0.0
        %v1121 = vand.u32 %v706, 4294901760
        %1122 = vmatmul.mubr.f32.gmra.mxu0 %v1121
        %v1123 = vpop.f32.mrf.mxu0
        %v1124 = vadd.f32 %v1039, %v1123
        %v1125 = vpop.f32.mrf.mxu0
        %1126 = vmatprep.mubr.f32.mxu0 0.0
        %v1127 = vand.u32 %v708, 4294901760
        %1128 = vmatmul.mubr.f32.gmra.mxu0 %v1127
        %v1129 = vpop.f32.mrf.mxu0
        %v1130 = vadd.f32 %v1047, %v1129
        %v1131 = vpop.f32.mrf.mxu0
        %1132 = vdwg.mxu0
        %1133 = vmatprep.subr.mxu0 0.0
        %1134 = vmatpush1.msra.mxu0 0.0
        %1135 = vmatprep.subr.mxu0 0.0
        %1136 = vmatpush1.msra.mxu0 0.0
        %1137 = vmatprep.subr.mxu0 0.0
        %1138 = vmatpush1.msra.mxu0 0.0
        %1139 = vmatprep.subr.mxu0 0.0
        %1140 = vmatpush1.msra.mxu0 0.0
        %1141 = vmatprep.subr.mxu0 0.0
        %1142 = vmatpush1.msra.mxu0 0.0
        %1143 = vmatprep.subr.mxu0 0.0
        %1144 = vmatpush1.msra.mxu0 0.0
        %1145 = vmatprep.subr.mxu0 0.0
        %1146 = vmatpush1.msra.mxu0 0.0
        %1147 = vmatprep.subr.mxu0 0.0
        %1148 = vmatpush1.msra.mxu0 0.0
        %1149 = vmatprep.subr.mxu0 0.0
        %1150 = vmatpush1.msra.mxu0 0.0
        %1151 = vmatprep.subr.mxu0 0.0
        %1152 = vmatpush1.msra.mxu0 0.0
        %1153 = vmatprep.subr.mxu0 0.0
        %1154 = vmatpush1.msra.mxu0 0.0
        %1155 = vmatprep.subr.mxu0 0.0
        %1156 = vmatpush1.msra.mxu0 0.0
        %1157 = vmatprep.subr.mxu0 0.0
        %1158 = vmatpush1.msra.mxu0 0.0
        %1159 = vmatprep.subr.mxu0 0.0
        %1160 = vmatpush1.msra.mxu0 0.0
        %1161 = vmatprep.subr.mxu0 0.0
        %v1162 = vand.u32 %v170, 4294901760
        %1163 = vmatpush1.msra.mxu0 %v1162
        %1164 = vmatprep.subr.mxu0 0.0
        %v1165 = vand.u32 %v169, 4294901760
        %1166 = vmatpush1.msra.mxu0 %v1165
        %1167 = vmatprep.subr.mxu0 0.0
        %1168 = vmatpush2.msra.mxu0 0.0
        %1169 = vmatprep.subr.mxu0 0.0
        %1170 = vmatpush2.msra.mxu0 0.0
        %1171 = vmatprep.subr.mxu0 0.0
        %1172 = vmatpush2.msra.mxu0 0.0
        %1173 = vmatprep.subr.mxu0 0.0
        %1174 = vmatpush2.msra.mxu0 0.0
        %1175 = vmatprep.subr.mxu0 0.0
        %1176 = vmatpush2.msra.mxu0 0.0
        %1177 = vmatprep.subr.mxu0 0.0
        %1178 = vmatpush2.msra.mxu0 0.0
        %1179 = vmatprep.subr.mxu0 0.0
        %1180 = vmatpush2.msra.mxu0 0.0
        %1181 = vmatprep.subr.mxu0 0.0
        %1182 = vmatpush2.msra.mxu0 0.0
        %1183 = vmatprep.subr.mxu0 0.0
        %1184 = vmatpush2.msra.mxu0 0.0
        %1185 = vmatprep.subr.mxu0 0.0
        %1186 = vmatpush2.msra.mxu0 0.0
        %1187 = vmatprep.subr.mxu0 0.0
        %1188 = vmatpush2.msra.mxu0 0.0
        %1189 = vmatprep.subr.mxu0 0.0
        %1190 = vmatpush2.msra.mxu0 0.0
        %1191 = vmatprep.subr.mxu0 0.0
        %1192 = vmatpush2.msra.mxu0 0.0
        %1193 = vmatprep.subr.mxu0 0.0
        %1194 = vmatpush2.msra.mxu0 0.0
        %1195 = vmatprep.subr.mxu0 0.0
        %1196 = vmatpush2.msra.mxu0 0.0
        %1197 = vmatprep.subr.mxu0 0.0
        %1198 = vmatpush2.msra.mxu0 0.0
        %1199 = vmatprep.mubr.f32.mxu0 0.0
        %v1200 = vand.u32 %v706, 4294901760
        %1201 = vmatmul.mubr.f32.gmra.mxu0 %v1200
        %v1202 = vpop.f32.mrf.mxu0
        %v1203 = vadd.f32 %v1124, %v1202
        %v1204 = vpop.f32.mrf.mxu0
        %1205 = vmatprep.mubr.f32.mxu0 0.0
        %v1206 = vand.u32 %v708, 4294901760
        %1207 = vmatmul.mubr.f32.gmra.mxu0 %v1206
        %v1208 = vpop.f32.mrf.mxu0
        %v1209 = vadd.f32 %v1130, %v1208
        %v1210 = vpop.f32.mrf.mxu0
        %1211 = vdwg.mxu0
        %vm1212 = vcmask 64512
        %1213 = vst.msk [vmem:[%s157] sm:$0xff] %vm1212, %v691
        %1214 = vst.msk [vmem:[%s157 + $0x8] sm:$0xff] %vm1212, %v697
        %1217 = vrot.lane.b32.xlu0 %v691, 120
        %v1218 = vpop.permute.xlu0 %1217
        %1219 = vrot.lane.b32.xlu0 %v697, 120
        %v1220 = vpop.permute.xlu0 %1219
        %s1223 = scalar_lea.vmem %s157, 16 [#allocation2]
        %1224 = vst.msk [vmem:[%s1223] sm:$0xff] %vm1212, %v1218
        %1225 = vst.msk [vmem:[%s1223 + $0x8] sm:$0xff] %vm1212, %v1220
        %s1226 = scalar_lea.vmem %s157, 32 [#allocation2]
        %1227 = vst.msk [vmem:[%s1226] sm:$0xff] %vm1212, %v1203
        %1228 = vst.msk [vmem:[%s1226 + $0x8] sm:$0xff] %vm1212, %v1209
        %1231 = vrot.lane.b32.xlu0 %v1203, 120
        %v1232 = vpop.permute.xlu0 %1231
        %1233 = vrot.lane.b32.xlu0 %v1209, 120
        %v1234 = vpop.permute.xlu0 %1233
        %s1237 = scalar_lea.vmem %s157, 48 [#allocation2]
        %1238 = vst.msk [vmem:[%s1237] sm:$0xff] %vm1212, %v1232
        %1239 = vst.msk [vmem:[%s1237 + $0x8] sm:$0xff] %vm1212, %v1234
        %s1240 = sand.u32 %s84, 1
        %s1241 = sand.u32 %s84, 1
        %s1242 = smul.addr %s1241, 64
        %s1243 = scalar_lea.vmem [#allocation2], %s1242
        // Predicated region
        $region29: #{dwt_forward.1} parent=27 // pred_check
          %p1244 = pneg %p94
        $region30: #{dwt_forward.1} parent=27 // pred_check_branch
          %1246 = sbr.rel (%p1244) target = $region32
        $region31: #{dwt_forward.1} parent=27 // pred_region
          %s1247 = smul.u32 2, %s18
          %s1248 = smul.addr %s17, 16
          %s1249 = sadd.s32 %s1247, %s1248
          %s1250 = smul.addr %s1249, 8
          %s1251 = scalar_lea.vmem %s2, %s1250
          // Predicated region
          $region33: #{dwt_forward.1} parent=31 // pred_check
            _
          $region34: #{dwt_forward.1} parent=31 // pred_check_branch
            %1253 = sbr.rel (0) target = $region36
          $region35: #{dwt_forward.1} parent=31 // pred_region
            // Predicated region
            $region37: #{dwt_forward.1} parent=35 // pred_check
              _
            $region38: #{dwt_forward.1} parent=35 // pred_check_branch
              %1255 = sbr.rel (0) target = $region40
            $region39: #{dwt_forward.1} parent=35 // pred_region
              // Predicated region
              $region52: #{dwt_forward.1} parent=39 // pred_check
                _
              $region53: #{dwt_forward.1} parent=39 // pred_check_branch
                %1285 = sbr.rel (0) target = $region55
              $region54: #{dwt_forward.1} parent=39 // pred_region
                loop: start=0, step=1, limit=1
                $region56: #{dwt_forward.1} parent=54 // loop_pre_header
                  _
                $region57: #{dwt_forward.1} parent=54 // loop_header
                  %s1287 = sphi 0, %s1291
                  %p1288 = scmp.ge.s32.totalorder %s1287, 1
                  %s1292 = sphi %s1243, %s1243
                  %s1293 = sphi %s1251, %s1251
                $region58: #{dwt_forward.1} parent=54 // loop_header_branch
                  %1290 = sbr.rel (%p1288) target = $region62
                $region59: #{dwt_forward.1} parent=54 // loop_body
                  %v1294 = vld [vmem:[%s1292] sm:$0xff]
                  %1295 = vst [vmem:[%s1293] sm:$0xff] %v1294
                  %v1296 = vld [vmem:[%s1292 + $0x8] sm:$0xff]
                  %1297 = vst [vmem:[%s1293 + $0x8] sm:$0xff] %v1296
                  %v1298 = vld [vmem:[%s1292 + $0x10] sm:$0xff]
                  %1299 = vst [vmem:[%s1293 + $0x20] sm:$0xff] %v1298
                  %v1300 = vld [vmem:[%s1292 + $0x18] sm:$0xff]
                  %1301 = vst [vmem:[%s1293 + $0x28] sm:$0xff] %v1300
                  %v1302 = vld [vmem:[%s1292 + $0x20] sm:$0xff]
                  %1303 = vst [vmem:[%s1293 + $0x40] sm:$0xff] %v1302
                  %v1304 = vld [vmem:[%s1292 + $0x28] sm:$0xff]
                  %1305 = vst [vmem:[%s1293 + $0x48] sm:$0xff] %v1304
                  %v1306 = vld [vmem:[%s1292 + $0x30] sm:$0xff]
                  %1307 = vst [vmem:[%s1293 + $0x60] sm:$0xff] %v1306
                  %v1308 = vld [vmem:[%s1292 + $0x38] sm:$0xff]
                  %1309 = vst [vmem:[%s1293 + $0x68] sm:$0xff] %v1308
                $region60: #{dwt_forward.1} parent=54 // loop_footer
                  %s1291 = sadd.s32 1, %s1287
                $region61: #{dwt_forward.1} parent=54 // loop_footer_branch
                  %1286 = sbr.rel target = $region57
                $region62: #{dwt_forward.1} parent=54 // loop_exit
                  _
              $region55: #{dwt_forward.1} parent=39 // pred_fallthru
                _
              // Predicated region
              $region63: #{dwt_forward.1} parent=39 // pred_check
                _
              $region64: #{dwt_forward.1} parent=39 // pred_check_branch
                %1311 = sbr.rel target = $region66
              $region65: #{dwt_forward.1} parent=39 // pred_region
                _
              $region66: #{dwt_forward.1} parent=39 // pred_fallthru
                _
            $region40: #{dwt_forward.1} parent=35 // pred_fallthru
              _
            // Predicated region
            $region41: #{dwt_forward.1} parent=35 // pred_check
              _
            $region42: #{dwt_forward.1} parent=35 // pred_check_branch
              %1257 = sbr.rel target = $region44
            $region43: #{dwt_forward.1} parent=35 // pred_region
              %s1259 = ssub.s32 256, 1
              loop: start=0, step=1, limit=1
              $region45: #{dwt_forward.1} parent=43 // loop_pre_header
                _
              $region46: #{dwt_forward.1} parent=43 // loop_header
                %s1261 = sphi 0, %s1265
                %p1262 = scmp.ge.s32.totalorder %s1261, 1
                %s1266 = sphi %s1243, %s1243
                %s1267 = sphi %s1251, %s1251
              $region47: #{dwt_forward.1} parent=43 // loop_header_branch
                %1264 = sbr.rel (%p1262) target = $region51
              $region48: #{dwt_forward.1} parent=43 // loop_body
                %v1268 = vld [vmem:[%s1266] sm:%s1259]
                %1269 = vst [vmem:[%s1267] sm:%s1259] %v1268
                %v1270 = vld [vmem:[%s1266 + $0x8] sm:%s1259]
                %1271 = vst [vmem:[%s1267 + $0x8] sm:%s1259] %v1270
                %v1272 = vld [vmem:[%s1266 + $0x10] sm:%s1259]
                %1273 = vst [vmem:[%s1267 + $0x20] sm:%s1259] %v1272
                %v1274 = vld [vmem:[%s1266 + $0x18] sm:%s1259]
                %1275 = vst [vmem:[%s1267 + $0x28] sm:%s1259] %v1274
                %v1276 = vld [vmem:[%s1266 + $0x20] sm:%s1259]
                %1277 = vst [vmem:[%s1267 + $0x40] sm:%s1259] %v1276
                %v1278 = vld [vmem:[%s1266 + $0x28] sm:%s1259]
                %1279 = vst [vmem:[%s1267 + $0x48] sm:%s1259] %v1278
                %v1280 = vld [vmem:[%s1266 + $0x30] sm:%s1259]
                %1281 = vst [vmem:[%s1267 + $0x60] sm:%s1259] %v1280
                %v1282 = vld [vmem:[%s1266 + $0x38] sm:%s1259]
                %1283 = vst [vmem:[%s1267 + $0x68] sm:%s1259] %v1282
              $region49: #{dwt_forward.1} parent=43 // loop_footer
                %s1265 = sadd.s32 1, %s1261
              $region50: #{dwt_forward.1} parent=43 // loop_footer_branch
                %1260 = sbr.rel target = $region46
              $region51: #{dwt_forward.1} parent=43 // loop_exit
                _
            $region44: #{dwt_forward.1} parent=35 // pred_fallthru
              _
          $region36: #{dwt_forward.1} parent=31 // pred_fallthru
            _
          %1312 = vnop
        $region32: #{dwt_forward.1} parent=27 // pred_fallthru
          _
      $region28: #{dwt_forward.1} parent=5 // pred_fallthru
        _
      %p1313 = scmp.le.s32.totalorder 2, %s8
      // Predicated region
      $region67: #{dwt_forward.1} parent=5 // pred_check
        %p1314 = pneg %p1313
      $region68: #{dwt_forward.1} parent=5 // pred_check_branch
        %1316 = sbr.rel (%p1314) target = $region70
      $region69: #{dwt_forward.1} parent=5 // pred_region
        %s1317 = ssub.s32 %s8, 2
        // Predicated region
        $region71: #{dwt_forward.1} parent=69 // pred_check
          %p1318 = pneg %p100
        $region72: #{dwt_forward.1} parent=69 // pred_check_branch
          %1320 = sbr.rel (%p1318) target = $region74
        $region73: #{dwt_forward.1} parent=69 // pred_region
          %s1321 = sand.u32 %s85, 1
          %s1322 = sand.u32 %s85, 1
          %s1323 = smul.addr %s1322, 64
          %s1324 = scalar_lea.vmem [#allocation2], %s1323
        $region74: #{dwt_forward.1} parent=69 // pred_fallthru
          _
      $region70: #{dwt_forward.1} parent=5 // pred_fallthru
        _
    $region6: #{dwt_forward.1} parent=1 // loop_footer
      %s12 = sadd.s32 1, %s8
    $region7: #{dwt_forward.1} parent=1 // loop_footer_branch
      %7 = sbr.rel target = $region3
    $region8: #{dwt_forward.1} parent=1 // loop_exit
      _

</llo_original>
